<compile_context>
chip_gen: v5e
topology: v5e:2x2
jax: 0.10.0
libtpu: 0.0.40
codegen_flags: <defaults>
</compile_context>

<pallas_src>
import functools

import jax
import jax.numpy as jnp
from jax.experimental import pallas as pl
from jax.experimental.pallas import tpu as pltpu


def _round_up(a: int, b: int) -> int:
    return (a + b - 1) // b * b


def _cdiv(a: int, b: int) -> int:
    return (a + b - 1) // b


# --------------------------------------------------------------------------
# Kernels
# --------------------------------------------------------------------------

def _swiglu_kernel_acc(x_ref, wg_ref, wv_ref, bg_ref, bv_ref, o_ref,
                       accg_ref, accv_ref):
    """Multi-K-step path: two f32 VMEM accumulators, epilogue at last K step."""
    k = pl.program_id(2)

    @pl.when(k == 0)
    def _init():
        accg_ref[...] = jnp.zeros_like(accg_ref)
        accv_ref[...] = jnp.zeros_like(accv_ref)

    x = x_ref[...]
    accg_ref[...] += jnp.dot(x, wg_ref[...], preferred_element_type=jnp.float32)
    accv_ref[...] += jnp.dot(x, wv_ref[...], preferred_element_type=jnp.float32)

    @pl.when(k == pl.num_programs(2) - 1)
    def _epilogue():
        gate = accg_ref[...] + bg_ref[...]
        value = accv_ref[...] + bv_ref[...]
        # Padded M rows produce silu(bias)*bias garbage here; sliced off outside.
        o_ref[...] = (gate * jax.nn.sigmoid(gate) * value).astype(o_ref.dtype)


def _swiglu_kernel_k1(x_ref, wg_ref, wv_ref, bg_ref, bv_ref, o_ref):
    """Fast path when D fits in one K tile: no scratch, no init, no RMW."""
    x = x_ref[...]
    gate = jnp.dot(x, wg_ref[...], preferred_element_type=jnp.float32) + bg_ref[...]
    value = jnp.dot(x, wv_ref[...], preferred_element_type=jnp.float32) + bv_ref[...]
    o_ref[...] = (gate * jax.nn.sigmoid(gate) * value).astype(o_ref.dtype)


# --------------------------------------------------------------------------
# Wrapper
# --------------------------------------------------------------------------

@functools.partial(jax.jit, static_argnames=("tm", "tn", "tk", "vmem_limit"))
def _swiglu_impl(x, w_gate, w_value, b_gate, b_value, *, tm, tn, tk, vmem_limit):
    orig_dtype = x.dtype
    B, S, D = x.shape
    H = w_gate.shape[1]
    M = B * S

    Mp = _round_up(M, tm)
    Hp = _round_up(H, tn)
    Dp = _round_up(D, tk)
    n_k = Dp // tk

    compute_dtype = jnp.bfloat16  # bf16 MXU inputs, f32 accumulation (intentional)

    def _prep(a, rows, cols, dtype):
        a = a.astype(dtype)
        pr, pc = rows - a.shape[0], cols - a.shape[1]
        if pr or pc:
            a = jnp.pad(a, ((0, pr), (0, pc)))
        return a

    x2d = _prep(x.reshape(M, D), Mp, Dp, compute_dtype)
    wg = _prep(w_gate, Dp, Hp, compute_dtype)
    wv = _prep(w_value, Dp, Hp, compute_dtype)
    bg = _prep(b_gate.reshape(1, H), 1, Hp, jnp.float32)
    bv = _prep(b_value.reshape(1, H), 1, Hp, jnp.float32)

    if n_k == 1:
        grid = (Mp // tm, Hp // tn)
        out2d = pl.pallas_call(
            _swiglu_kernel_k1,
            out_shape=jax.ShapeDtypeStruct((Mp, Hp), orig_dtype),
            grid_spec=pltpu.PrefetchScalarGridSpec(
                num_scalar_prefetch=0,
                grid=grid,
                in_specs=[
                    pl.BlockSpec((tm, tk), lambda i, j: (i, 0)),   # x tile
                    pl.BlockSpec((tk, tn), lambda i, j: (0, j)),   # Wg tile
                    pl.BlockSpec((tk, tn), lambda i, j: (0, j)),   # Wv tile
                    pl.BlockSpec((1, tn), lambda i, j: (0, j)),    # bg tile
                    pl.BlockSpec((1, tn), lambda i, j: (0, j)),    # bv tile
                ],
                out_specs=pl.BlockSpec((tm, tn), lambda i, j: (i, j)),
            ),
            compiler_params=pltpu.CompilerParams(
                dimension_semantics=("parallel", "parallel"),
                vmem_limit_bytes=vmem_limit,
            ),
        )(x2d, wg, wv, bg, bv)
    else:
        grid = (Mp // tm, Hp // tn, n_k)
        out2d = pl.pallas_call(
            _swiglu_kernel_acc,
            out_shape=jax.ShapeDtypeStruct((Mp, Hp), orig_dtype),
            grid_spec=pltpu.PrefetchScalarGridSpec(
                num_scalar_prefetch=0,
                grid=grid,
                in_specs=[
                    pl.BlockSpec((tm, tk), lambda i, j, k: (i, k)),  # x tile
                    pl.BlockSpec((tk, tn), lambda i, j, k: (k, j)),  # Wg tile
                    pl.BlockSpec((tk, tn), lambda i, j, k: (k, j)),  # Wv tile
                    pl.BlockSpec((1, tn), lambda i, j, k: (0, j)),   # bg tile
                    pl.BlockSpec((1, tn), lambda i, j, k: (0, j)),   # bv tile
                ],
                out_specs=pl.BlockSpec((tm, tn), lambda i, j, k: (i, j)),
                scratch_shapes=[pltpu.VMEM((tm, tn), jnp.float32),   # gate acc
                                pltpu.VMEM((tm, tn), jnp.float32)],  # value acc
            ),
            compiler_params=pltpu.CompilerParams(
                dimension_semantics=("parallel", "parallel", "arbitrary"),
                vmem_limit_bytes=vmem_limit,
            ),
        )(x2d, wg, wv, bg, bv)

    return out2d[:M, :H].reshape(B, S, H)


def _device_kind() -> str:
    try:
        return jax.devices()[0].device_kind.lower()
    except Exception:
        return ""


def _pick_tiles(M, H, D, tm_max, tn_max, tk_max, kind):
    """Generation-aware tile selection (all static Python ints)."""
    if tm_max is None or tn_max is None or tk_max is None:
        if "v6" in kind:
            dm, dn, dk = 2048, 512, 1024   # I ~ 680 FLOP/B > v6e ridge (~650)
        elif "v7" in kind:
            dm, dn, dk = 512, 512, 2048    # I ~ 340 > v7x ridge; fits 64 MiB VMEM
        else:                              # v5e and unknown parts
            dm, dn, dk = 512, 512, 2048    # I ~ 340 > v5e ridge (~240)
        tm_max = tm_max if tm_max is not None else dm
        tn_max = tn_max if tn_max is not None else dn
        tk_max = tk_max if tk_max is not None else dk

    tm = min(tm_max, _round_up(M, 8))
    tn = min(tn_max, _round_up(H, 128))
    # Even, 128-aligned K split: caps zero-padding at 127 columns.
    n_k = max(1, _cdiv(D, tk_max))
    tk = _round_up(_cdiv(D, n_k), 128)

    # v7x has 2 TensorCores: keep at least one "parallel" axis with extent >= 2
    # when the problem is big enough, otherwise a core idles.
    if "v7" in kind and _cdiv(M, tm) == 1 and _cdiv(H, tn) == 1:
        if H >= 256:
            tn = max(128, _round_up(_cdiv(H, 2), 128))
        elif M >= 16:
            tm = _round_up(_cdiv(M, 2), 8)
    return tm, tn, tk


def _vmem_limit(tm, tn, tk, n_k, out_itemsize, kind) -> int:
    """Derive the scoped-VMEM limit from the real tile footprint, per chip."""
    buf = (2 * tm * tk * 2              # x tile (bf16), double-buffered
           + 2 * 2 * tk * tn * 2        # Wg + Wv tiles (bf16), double-buffered
           + 2 * 2 * tn * 4             # bias tiles
           + 2 * tm * tn * out_itemsize                 # out tile, double-buffered
           + (2 * tm * tn * 4 if n_k > 1 else 0))       # f32 accumulators
    cap = (56 << 20) if "v7" in kind else (100 << 20)   # keep v7x headroom
    return int(min(max(buf + (8 << 20), 32 << 20), cap))


def swiglu(x, w_gate, w_value, b_gate, b_value, *,
           tm_max=None, tn_max=None, tk_max=None):
    """SwiGLU forward.  x: (B, S, D); w_*: (D, H); b_*: (H,).  Returns (B, S, H)."""
    B, S, D = x.shape
    H = w_gate.shape[1]
    M = B * S
    kind = _device_kind()
    tm, tn, tk = _pick_tiles(M, H, D, tm_max, tn_max, tk_max, kind)
    n_k = _round_up(D, tk) // tk
    vmem_limit = _vmem_limit(tm, tn, tk, n_k, jnp.dtype(x.dtype).itemsize, kind)
    return _swiglu_impl(x, w_gate, w_value, b_gate, b_value,
                        tm=tm, tn=tn, tk=tk, vmem_limit=vmem_limit)


# --------------------------------------------------------------------------
# Self-test
# --------------------------------------------------------------------------

if __name__ == "__main__":
    key = jax.random.PRNGKey(0)

    def make_inputs(k, B, S, D, H):
        kx, kg, kv, kbg, kbv = jax.random.split(k, 5)
        bound = 1.0 / (D ** 0.5)   # PyTorch nn.Linear-style uniform bound
        x = jax.random.normal(kx, (B, S, D), dtype=jnp.float32)
        w_gate = jax.random.uniform(kg, (D, H), jnp.float32, -bound, bound)
        w_value = jax.random.uniform(kv, (D, H), jnp.float32, -bound, bound)
        b_gate = jax.random.uniform(kbg, (H,), jnp.float32, -bound, bound)
        b_value = jax.random.uniform(kbv, (H,), jnp.float32, -bound, bound)
        return x, w_gate, w_value, b_gate, b_value

    def reference(x, wg, wv, bg, bv):
        # Pure-JAX reference emulating the kernel's bf16-input / f32-accum matmuls.
        hi = jax.lax.Precision.HIGHEST
        xb = x.astype(jnp.bfloat16).astype(jnp.float32)
        wgb = wg.astype(jnp.bfloat16).astype(jnp.float32)
        wvb = wv.astype(jnp.bfloat16).astype(jnp.float32)
        gate = jnp.einsum("bsd,dh->bsh", xb, wgb, precision=hi) + bg
        value = jnp.einsum("bsd,dh->bsh", xb, wvb, precision=hi) + bv
        return jax.nn.silu(gate) * value

    k1, k2 = jax.random.split(key)

    # Test 1: module-sized shapes (single K step -> no-scratch fast path).
    args1 = make_inputs(k1, B=2, S=8, D=32, H=64)
    out1 = jax.block_until_ready(swiglu(*args1))
    ref1 = reference(*args1)
    assert out1.shape == (2, 8, 64)
    assert jnp.allclose(out1, ref1, atol=2e-3, rtol=2e-3), (
        float(jnp.max(jnp.abs(out1 - ref1))))

    # Test 2: force tiny tiles to exercise the multi-K accumulator path,
    # multiple N tiles, and D/H padding + output slicing.
    args2 = make_inputs(k2, B=2, S=8, D=160, H=320)
    out2 = jax.block_until_ready(
        swiglu(*args2, tm_max=16, tn_max=128, tk_max=128))
    ref2 = reference(*args2)
    assert out2.shape == (2, 8, 320)
    assert jnp.allclose(out2, ref2, atol=5e-3, rtol=5e-3), (
        float(jnp.max(jnp.abs(out2 - ref2))))

    print("KERNEL_OK")
</pallas_src>

<mosaic_0001>
module attributes {stable_mosaic.version = 11 : i64} {
  func.func @_swiglu_kernel_k1(%arg0: i32, %arg1: i32, %arg2: memref<16x128xbf16, #tpu.memory_space<vmem>>, %arg3: memref<128x128xbf16, #tpu.memory_space<vmem>>, %arg4: memref<128x128xbf16, #tpu.memory_space<vmem>>, %arg5: memref<1x128xf32, #tpu.memory_space<vmem>>, %arg6: memref<1x128xf32, #tpu.memory_space<vmem>>, %arg7: memref<16x128xf32, #tpu.memory_space<vmem>>) attributes {dimension_semantics = [#tpu.dimension_semantics<parallel>, #tpu.dimension_semantics<parallel>], iteration_bounds = array<i64: 1, 1>, scalar_prefetch = 0 : i64, scratch_operands = 0 : i64, tpu.core_type = #tpu.core_type<tc>, window_params = [{transform_indices = @transform_0, window_bounds = array<i64: 16, 128>}, {transform_indices = @transform_1, window_bounds = array<i64: 128, 128>}, {transform_indices = @transform_2, window_bounds = array<i64: 128, 128>}, {transform_indices = @transform_3, window_bounds = array<i64: 1, 128>}, {transform_indices = @transform_4, window_bounds = array<i64: 1, 128>}, {transform_indices = @transform_5, window_bounds = array<i64: 16, 128>}]} {
    %c0 = arith.constant 0 : index
    %c0_0 = arith.constant 0 : index
    %0 = vector.load %arg2[%c0, %c0_0] : memref<16x128xbf16, #tpu.memory_space<vmem>>, vector<16x128xbf16>
    %c0_1 = arith.constant 0 : index
    %c0_2 = arith.constant 0 : index
    %1 = vector.load %arg3[%c0_1, %c0_2] : memref<128x128xbf16, #tpu.memory_space<vmem>>, vector<128x128xbf16>
    %cst = arith.constant dense<0.000000e+00> : vector<16x128xf32>
    %2 = tpu.matmul %0, %1, %cst {dimension_numbers = #tpu.dot_dimension_numbers<[1], [0], [0], [1], [0, 0, 1, 1], [], []>} : vector<16x128xbf16>, vector<128x128xbf16>, vector<16x128xf32> -> vector<16x128xf32>
    %c0_3 = arith.constant 0 : index
    %c0_4 = arith.constant 0 : index
    %3 = vector.load %arg5[%c0_3, %c0_4] : memref<1x128xf32, #tpu.memory_space<vmem>>, vector<1x128xf32>
    %4 = vector.broadcast %3 : vector<1x128xf32> to vector<16x128xf32>
    %5 = arith.addf %2, %4 : vector<16x128xf32>
    %c0_5 = arith.constant 0 : index
    %c0_6 = arith.constant 0 : index
    %6 = vector.load %arg4[%c0_5, %c0_6] : memref<128x128xbf16, #tpu.memory_space<vmem>>, vector<128x128xbf16>
    %cst_7 = arith.constant dense<0.000000e+00> : vector<16x128xf32>
    %7 = tpu.matmul %0, %6, %cst_7 {dimension_numbers = #tpu.dot_dimension_numbers<[1], [0], [0], [1], [0, 0, 1, 1], [], []>} : vector<16x128xbf16>, vector<128x128xbf16>, vector<16x128xf32> -> vector<16x128xf32>
    %c0_8 = arith.constant 0 : index
    %c0_9 = arith.constant 0 : index
    %8 = vector.load %arg6[%c0_8, %c0_9] : memref<1x128xf32, #tpu.memory_space<vmem>>, vector<1x128xf32>
    %9 = vector.broadcast %8 : vector<1x128xf32> to vector<16x128xf32>
    %10 = arith.addf %7, %9 : vector<16x128xf32>
    %11 = arith.negf %5 : vector<16x128xf32>
    %12 = math.exp %11 : vector<16x128xf32>
    %cst_10 = arith.constant 1.000000e+00 : f32
    %13 = vector.broadcast %cst_10 : f32 to vector<16x128xf32>
    %14 = arith.addf %13, %12 : vector<16x128xf32>
    %15 = arith.divf %13, %14 : vector<16x128xf32>
    %16 = arith.mulf %5, %15 : vector<16x128xf32>
    %17 = arith.mulf %16, %10 : vector<16x128xf32>
    %c0_11 = arith.constant 0 : index
    %c0_12 = arith.constant 0 : index
    %18 = vector.load %arg7[%c0_11, %c0_12] : memref<16x128xf32, #tpu.memory_space<vmem>>, vector<16x128xf32>
    tpu.vector_store %arg7[%c0_11, %c0_12], %17 {strides = array<i32>} : memref<16x128xf32, #tpu.memory_space<vmem>>, vector<16x128xf32>,
    return
  }
  func.func @transform_0(%arg0: i32, %arg1: i32) -> (i32, i32) {
    %c0_i32 = arith.constant 0 : i32
    %c0_i32_0 = arith.constant 0 : i32
    return %arg0, %c0_i32 : i32, i32
  }
  func.func @transform_1(%arg0: i32, %arg1: i32) -> (i32, i32) {
    %c0_i32 = arith.constant 0 : i32
    %c0_i32_0 = arith.constant 0 : i32
    return %c0_i32, %arg1 : i32, i32
  }
  func.func @transform_2(%arg0: i32, %arg1: i32) -> (i32, i32) {
    %c0_i32 = arith.constant 0 : i32
    %c0_i32_0 = arith.constant 0 : i32
    return %c0_i32, %arg1 : i32, i32
  }
  func.func @transform_3(%arg0: i32, %arg1: i32) -> (i32, i32) {
    %c0_i32 = arith.constant 0 : i32
    %c0_i32_0 = arith.constant 0 : i32
    return %c0_i32, %arg1 : i32, i32
  }
  func.func @transform_4(%arg0: i32, %arg1: i32) -> (i32, i32) {
    %c0_i32 = arith.constant 0 : i32
    %c0_i32_0 = arith.constant 0 : i32
    return %c0_i32, %arg1 : i32, i32
  }
  func.func @transform_5(%arg0: i32, %arg1: i32) -> (i32, i32) {
    %c0_i32 = arith.constant 0 : i32
    return %arg0, %arg1 : i32, i32
  }
}

</mosaic_0001>

<llo_original>
// kernel: _swiglu_impl.1
$region0: #{_swiglu_impl.1}
  #allocation0 [shape = 'u32[]', space=smem, size = 0x4, offset = 0x4, fixed_abs, tag = 'smem constant byte address 0x4 - core index']
  #allocation1 [shape = 'u32[72,128]{1,0:T(1,128)}', space=vmem, size = 0x9000, scoped, tag = 'internal scratch']
  %s0 = inlined_call_operand.vmem [shape: bf16[16,128], index: 0, kind: input, shape index: {}]
  %s1 = inlined_call_operand.vmem [shape: bf16[128,128], index: 1, kind: input, shape index: {}]
  %s2 = inlined_call_operand.vmem [shape: bf16[128,128], index: 2, kind: input, shape index: {}]
  %s3 = inlined_call_operand.vmem [shape: f32[1,128], index: 3, kind: input, shape index: {}]
  %s4 = inlined_call_operand.vmem [shape: f32[1,128], index: 4, kind: input, shape index: {}]
  %s5 = inlined_call_operand.vmem [shape: f32[16,128], index: 5, kind: output, shape index: {}]
  %s6 = sld [smem:[#allocation0]]
  $region30: #{_swiglu_impl.1} parent=0
    _
  %s8 = ssub.s32 1, %s6
  %s9 = scalar_select 0, %s8, %s6
  // Predicated region
  $region2: #{_swiglu_impl.1} parent=0 // pred_check
    _
  $region3: #{_swiglu_impl.1} parent=0 // pred_check_branch
    %11 = sbr.rel (0) target = $region5
  $region4: #{_swiglu_impl.1} parent=0 // pred_region
    _
  $region5: #{_swiglu_impl.1} parent=0 // pred_fallthru
    _
  // Predicated region
  $region6: #{_swiglu_impl.1} parent=0 // pred_check
    _
  $region7: #{_swiglu_impl.1} parent=0 // pred_check_branch
    %13 = sbr.rel (0) target = $region9
  $region8: #{_swiglu_impl.1} parent=0 // pred_region
    _
  $region9: #{_swiglu_impl.1} parent=0 // pred_fallthru
    _
  // Predicated region
  $region10: #{_swiglu_impl.1} parent=0 // pred_check
    _
  $region11: #{_swiglu_impl.1} parent=0 // pred_check_branch
    %15 = sbr.rel (0) target = $region13
  $region12: #{_swiglu_impl.1} parent=0 // pred_region
    _
  $region13: #{_swiglu_impl.1} parent=0 // pred_fallthru
    _
  // Predicated region
  $region14: #{_swiglu_impl.1} parent=0 // pred_check
    _
  $region15: #{_swiglu_impl.1} parent=0 // pred_check_branch
    %17 = sbr.rel (0) target = $region17
  $region16: #{_swiglu_impl.1} parent=0 // pred_region
    _
  $region17: #{_swiglu_impl.1} parent=0 // pred_fallthru
    _
  // Predicated region
  $region18: #{_swiglu_impl.1} parent=0 // pred_check
    _
  $region19: #{_swiglu_impl.1} parent=0 // pred_check_branch
    %19 = sbr.rel (0) target = $region21
  $region20: #{_swiglu_impl.1} parent=0 // pred_region
    _
  $region21: #{_swiglu_impl.1} parent=0 // pred_fallthru
    _
  %v20 = vld [vmem:[%s0] sm:$0xf]
  %v21 = vld [vmem:[%s0 + $0x4] sm:$0xf]
  %v22 = vld [vmem:[%s1] sm:$0xf]
  %v23 = vld [vmem:[%s1 + $0x4] sm:$0xf]
  %v24 = vld [vmem:[%s1 + $0x8] sm:$0xf]
  %v25 = vld [vmem:[%s1 + $0xc] sm:$0xf]
  %v26 = vld [vmem:[%s1 + $0x10] sm:$0xf]
  %v27 = vld [vmem:[%s1 + $0x14] sm:$0xf]
  %v28 = vld [vmem:[%s1 + $0x18] sm:$0xf]
  %v29 = vld [vmem:[%s1 + $0x1c] sm:$0xf]
  %v30 = vld [vmem:[%s1 + $0x20] sm:$0xf]
  %v31 = vld [vmem:[%s1 + $0x24] sm:$0xf]
  %v32 = vld [vmem:[%s1 + $0x28] sm:$0xf]
  %v33 = vld [vmem:[%s1 + $0x2c] sm:$0xf]
  %v34 = vld [vmem:[%s1 + $0x30] sm:$0xf]
  %v35 = vld [vmem:[%s1 + $0x34] sm:$0xf]
  %v36 = vld [vmem:[%s1 + $0x38] sm:$0xf]
  %v37 = vld [vmem:[%s1 + $0x3c] sm:$0xf]
  %v38 = vld [vmem:[%s3] sm:$0x1]
  %v40 = vperm.slane %v38, 0
  %v44 = vunpack.c.l.b16 %v20
  %v45 = vunpack.c.l.b16 %v21
  %v46 = vpack.c.b16 %v45, %v44
  %v64 = vunpack.c.l.b16 %v22
  %v65 = vunpack.c.l.b16 %v23
  %v66 = vunpack.c.l.b16 %v24
  %v67 = vunpack.c.l.b16 %v25
  %v68 = vunpack.c.l.b16 %v26
  %v69 = vunpack.c.l.b16 %v27
  %v70 = vunpack.c.l.b16 %v28
  %v71 = vunpack.c.l.b16 %v29
  %v72 = vunpack.c.l.b16 %v30
  %v73 = vunpack.c.l.b16 %v31
  %v74 = vunpack.c.l.b16 %v32
  %v75 = vunpack.c.l.b16 %v33
  %v76 = vunpack.c.l.b16 %v34
  %v77 = vunpack.c.l.b16 %v35
  %v78 = vunpack.c.l.b16 %v36
  %v79 = vunpack.c.l.b16 %v37
  %v80 = vpack.c.b16 %v65, %v64
  %v81 = vpack.c.b16 %v67, %v66
  %v82 = vpack.c.b16 %v69, %v68
  %v83 = vpack.c.b16 %v71, %v70
  %v84 = vpack.c.b16 %v73, %v72
  %v85 = vpack.c.b16 %v75, %v74
  %v86 = vpack.c.b16 %v77, %v76
  %v87 = vpack.c.b16 %v79, %v78
  %96 = vmatpush.bf16.msra.mxu0 %v87
  %97 = vmatpush.bf16.msra.mxu0 %v86
  %98 = vmatpush.bf16.msra.mxu0 %v85
  %99 = vmatpush.bf16.msra.mxu0 %v84
  %100 = vmatpush.bf16.msra.mxu0 %v83
  %101 = vmatpush.bf16.msra.mxu0 %v82
  %102 = vmatpush.bf16.msra.mxu0 %v81
  %103 = vmatpush.bf16.msra.mxu0 %v80
  %104 = vmatmul.bf16.gmra.mxu0 %v46
  %v105 = vpop.f32.mrf.mxu0
  %v106 = vadd.f32 %v40, %v105
  %v107 = vpop.f32.mrf.mxu0
  %v108 = vadd.f32 %v40, %v107
  %109 = vdwg.mxu0
  %v110 = vld [vmem:[%s2] sm:$0xf]
  %v111 = vld [vmem:[%s2 + $0x4] sm:$0xf]
  %v112 = vld [vmem:[%s2 + $0x8] sm:$0xf]
  %v113 = vld [vmem:[%s2 + $0xc] sm:$0xf]
  %v114 = vld [vmem:[%s2 + $0x10] sm:$0xf]
  %v115 = vld [vmem:[%s2 + $0x14] sm:$0xf]
  %v116 = vld [vmem:[%s2 + $0x18] sm:$0xf]
  %v117 = vld [vmem:[%s2 + $0x1c] sm:$0xf]
  %v118 = vld [vmem:[%s2 + $0x20] sm:$0xf]
  %v119 = vld [vmem:[%s2 + $0x24] sm:$0xf]
  %v120 = vld [vmem:[%s2 + $0x28] sm:$0xf]
  %v121 = vld [vmem:[%s2 + $0x2c] sm:$0xf]
  %v122 = vld [vmem:[%s2 + $0x30] sm:$0xf]
  %v123 = vld [vmem:[%s2 + $0x34] sm:$0xf]
  %v124 = vld [vmem:[%s2 + $0x38] sm:$0xf]
  %v125 = vld [vmem:[%s2 + $0x3c] sm:$0xf]
  %v126 = vld [vmem:[%s4] sm:$0x1]
  %v128 = vperm.slane %v126, 0
  %v146 = vunpack.c.l.b16 %v110
  %v147 = vunpack.c.l.b16 %v111
  %v148 = vunpack.c.l.b16 %v112
  %v149 = vunpack.c.l.b16 %v113
  %v150 = vunpack.c.l.b16 %v114
  %v151 = vunpack.c.l.b16 %v115
  %v152 = vunpack.c.l.b16 %v116
  %v153 = vunpack.c.l.b16 %v117
  %v154 = vunpack.c.l.b16 %v118
  %v155 = vunpack.c.l.b16 %v119
  %v156 = vunpack.c.l.b16 %v120
  %v157 = vunpack.c.l.b16 %v121
  %v158 = vunpack.c.l.b16 %v122
  %v159 = vunpack.c.l.b16 %v123
  %v160 = vunpack.c.l.b16 %v124
  %v161 = vunpack.c.l.b16 %v125
  %v162 = vpack.c.b16 %v147, %v146
  %v163 = vpack.c.b16 %v149, %v148
  %v164 = vpack.c.b16 %v151, %v150
  %v165 = vpack.c.b16 %v153, %v152
  %v166 = vpack.c.b16 %v155, %v154
  %v167 = vpack.c.b16 %v157, %v156
  %v168 = vpack.c.b16 %v159, %v158
  %v169 = vpack.c.b16 %v161, %v160
  %178 = vmatpush.bf16.msra.mxu0 %v169
  %179 = vmatpush.bf16.msra.mxu0 %v168
  %180 = vmatpush.bf16.msra.mxu0 %v167
  %181 = vmatpush.bf16.msra.mxu0 %v166
  %182 = vmatpush.bf16.msra.mxu0 %v165
  %183 = vmatpush.bf16.msra.mxu0 %v164
  %184 = vmatpush.bf16.msra.mxu0 %v163
  %185 = vmatpush.bf16.msra.mxu0 %v162
  %186 = vmatmul.bf16.gmra.mxu0 %v46
  %v187 = vpop.f32.mrf.mxu0
  %v188 = vadd.f32 %v128, %v187
  %v189 = vpop.f32.mrf.mxu0
  %v190 = vadd.f32 %v128, %v189
  %191 = vdwg.mxu0
  %v192 = vxor.u32 %v106, 2147483648
  %v193 = vxor.u32 %v108, 2147483648
  %v194 = vmul.f32 %v192, 1.442695
  %v195 = vpow.pop %v194
  %v196 = vmul.f32 %v193, 1.442695
  %v197 = vpow.pop %v196
  %v198 = vadd.f32 %v195, 1.0
  %v199 = vadd.f32 %v197, 1.0
  %v200 = vrcp.pop %v198
  %v201 = vmul.f32 %v198, %v200
  %v202 = vsub.f32 1.0, %v201
  %v203 = vmul.f32 %v200, %v202
  %v204 = vadd.f32 %v200, %v203
  %vm205 = vweird.f32 %v198
  %vm206 = vweird.f32 %v200
  %vm207 = vmor %vm205, %vm206
  %v208 = vsel %vm207, %v200, %v204
  %v209 = vand.u32 2147483647, %v198
  %vm210 = vcmp.eq.f32.partialorder %v209, 8.507059e+37
  %v211 = vand.u32 %v198, 2147483648
  %v212 = vor.u32 1.1754944e-38, %v211
  %v213 = vsel %vm210, %v212, %v208
  %v214 = vmul.f32 1.0, %v213
  %v215 = vrcp.pop %v199
  %v216 = vmul.f32 %v199, %v215
  %v217 = vsub.f32 1.0, %v216
  %v218 = vmul.f32 %v215, %v217
  %v219 = vadd.f32 %v215, %v218
  %vm220 = vweird.f32 %v199
  %vm221 = vweird.f32 %v215
  %vm222 = vmor %vm220, %vm221
  %v223 = vsel %vm222, %v215, %v219
  %v224 = vand.u32 2147483647, %v199
  %vm225 = vcmp.eq.f32.partialorder %v224, 8.507059e+37
  %v226 = vand.u32 %v199, 2147483648
  %v227 = vor.u32 1.1754944e-38, %v226
  %v228 = vsel %vm225, %v227, %v223
  %v229 = vmul.f32 1.0, %v228
  %v230 = vmul.f32 %v106, %v214
  %v231 = vmul.f32 %v108, %v229
  %v232 = vmul.f32 %v230, %v188
  %v233 = vmul.f32 %v231, %v190
  %234 = vst [vmem:[%s5] sm:$0xff] %v232
  %235 = vst [vmem:[%s5 + $0x8] sm:$0xff] %v233
  // Predicated region
  $region22: #{_swiglu_impl.1} parent=0 // pred_check
    _
  $region23: #{_swiglu_impl.1} parent=0 // pred_check_branch
    %237 = sbr.rel (0) target = $region25
  $region24: #{_swiglu_impl.1} parent=0 // pred_region
    _
  $region25: #{_swiglu_impl.1} parent=0 // pred_fallthru
    _
  // Predicated region
  $region26: #{_swiglu_impl.1} parent=0 // pred_check
    _
  $region27: #{_swiglu_impl.1} parent=0 // pred_check_branch
    %239 = sbr.rel (0) target = $region29
  $region28: #{_swiglu_impl.1} parent=0 // pred_region
    _
  $region29: #{_swiglu_impl.1} parent=0 // pred_fallthru
    _

</llo_original>
